<compile_context>
chip_gen: v5e
topology: v5e:2x2
jax: 0.10.0
libtpu: 0.0.40
codegen_flags: <defaults>
</compile_context>

<pallas_src>
import functools

import numpy as np

import jax
import jax.numpy as jnp
from jax.experimental import pallas as pl
from jax.experimental.pallas import tpu as pltpu


# ------------------------------ kernel ------------------------------------ #

def _dual_attention_kernel(x_ref, wcat_ref, bcat_ref, w2_ref, b2_ref,
                           wc9_ref, mpre_ref, bc_ref, o_ref, *, H, W, C, BB):
    # x_ref   : (BB, C, HW)    BB batch elements, spatial flattened (lane-dense)
    # wcat_ref: (C+C16, C)     [acrosome Linear ; SE squeeze] stacked on out dim
    # bcat_ref: (C+C16, 1)     matching biases
    # w2_ref  : (C, C16)       SE excite weight, b2_ref: (C, 1)
    # wc9_ref : (9, C)         3x3 conv weight, tap-major (ky*3+kx, c)
    # mpre_ref: (9, HW)        static 0/1 halo masks, pre-rolled (applied pre-roll)
    # bc_ref  : (1, 1) SMEM    conv bias
    HW = H * W
    x = x_ref[...]                                               # (BB, C, HW) f32

    # ---- channel branch (batched over BB): global avg pool + acrosome mask
    #      + SE MLP.  Pooled columns stacked on lanes -> matmul N = BB. ----- #
    cols = [jnp.mean(x[b], axis=-1, keepdims=True) for b in range(BB)]   # BB x (C, 1)
    pooled = cols[0] if BB == 1 else jnp.concatenate(cols, axis=1)       # (C, BB)
    y = jnp.dot(wcat_ref[...], pooled,
                preferred_element_type=jnp.float32) + bcat_ref[...]      # (C+C16, BB)
    acro = jax.nn.sigmoid(y[:C])                                 # acrosome mask (C, BB)
    h = jnp.maximum(y[C:], 0.0)                                  # ReLU squeeze  (C16, BB)
    ca = jax.nn.sigmoid(
        jnp.dot(w2_ref[...], h, preferred_element_type=jnp.float32)
        + b2_ref[...])                                           # SE excite     (C, BB)
    cs = ca * acro                                               # channel scale (C, BB)

    # ---- spatial branch: per batch element, 3x3 single-output-channel conv
    #      as ONE (9, C) @ (C, HW) MXU matmul; halo handled with the static
    #      pre-rolled masks (one multiply) + 9 static lane rolls (XLU). ----- #
    mpre = mpre_ref[...]                                         # (9, HW)
    wc9 = wc9_ref[...]                                           # (9, C)
    bc = bc_ref[0, 0]
    use_xlu_roll = (HW % 128 == 0)   # roll lowers to a lane vrot; 256 here

    for b in range(BB):
        xb = x[b]                                                # (C, HW)
        d = jnp.dot(wc9, xb, preferred_element_type=jnp.float32)  # (9, HW)
        dm = d * mpre                                            # mask BEFORE roll
        ss = None
        for t in range(9):
            dy, dx = t // 3, t % 3
            off = (dy - 1) * W + (dx - 1)                        # out[p] <- dm[t, p+off]
            row = dm[t:t + 1, :]                                 # (1, HW)
            if off % HW != 0:
                if use_xlu_roll:
                    row = pltpu.roll(row, shift=(-off) % HW, axis=1)
                else:  # fallback when HW is not a multiple of 128 lanes
                    s = off % HW
                    row = jnp.concatenate([row[:, s:], row[:, :s]], axis=1)
            # conv bias folded into the accumulator init
            ss = (row + bc) if ss is None else (ss + row)
        ss = jax.nn.sigmoid(ss)                                  # spatial scale (1, HW)

        # combine: x*channel_scale + x*spatial_scale = x*(cs + ss)
        o_ref[b] = xb * (cs[:, b:b + 1] + ss)


# ------------------------------ helpers ------------------------------------ #

def _premasks(H, W):
    """(9, H*W) static 0/1 masks, PRE-rolled so they can be applied before the
    lane roll:  pre[t, q] = post[t, (q - off_t) % HW], where
    post[t, p] = 1 iff tap t is in-bounds for output pixel p."""
    HW = H * W
    p = np.arange(HW)
    row, col = p // W, p % W
    m = np.zeros((9, HW), np.float32)
    for t in range(9):
        sy, sx = t // 3 - 1, t % 3 - 1
        post = ((row + sy >= 0) & (row + sy < H) &
                (col + sx >= 0) & (col + sx < W)).astype(np.float32)
        m[t] = np.roll(post, sy * W + sx)
    return m


def _pick_batch_block(B, C, HW):
    """Largest BB that (a) divides B, (b) keeps the x block <= ~4 MiB (v7x-safe
    with double-buffered in+out blocks), and (c) leaves >= 2 grid steps when
    B >= 2 so both v7x TensorCores get work (v5e/v6e have a single TC)."""
    cap = max(1, (4 * 1024 * 1024) // (C * HW * 4))
    best = 1
    for bb in range(1, B + 1):
        if B % bb == 0 and bb <= cap and (B < 2 or B // bb >= 2):
            best = bb
    return best


# ------------------------------ wrapper ------------------------------------ #

def dual_attention(x, params):
    """x: (B, C, H, W) float32. params stored in PyTorch (out, in[, kh, kw]) layout."""
    B, C, H, W = x.shape
    HW = H * W
    C16 = params["w1"].shape[0]

    we, be = params["we"], params["be"]          # (C, C), (C,)
    w1, b1 = params["w1"], params["b1"]          # (C16, C), (C16,)
    w2, b2 = params["w2"], params["b2"]          # (C, C16), (C,)
    wc, bc = params["wc"], params["bc"]          # (1, C, 3, 3), (1,)

    # One-time weight repacking (tiny XLA ops outside the kernel).
    wcat = jnp.concatenate([we, w1], axis=0)                        # (C+C16, C)
    bcat = jnp.concatenate([be, b1], axis=0).reshape(C + C16, 1)    # (C+C16, 1)
    b2c = b2.reshape(C, 1)                                          # (C, 1)
    wc9 = jnp.transpose(wc[0], (1, 2, 0)).reshape(9, C)             # (9, C): [ky*3+kx, c]
    bcs = bc.reshape(1, 1)                                          # SMEM scalar
    mpre = jnp.asarray(_premasks(H, W))                             # (9, HW) constant

    x3 = x.reshape(B, C, HW)                                        # lane-dense view
    bb = _pick_batch_block(B, C, HW)

    out3 = pl.pallas_call(
        functools.partial(_dual_attention_kernel, H=H, W=W, C=C, BB=bb),
        out_shape=jax.ShapeDtypeStruct((B, C, HW), jnp.float32),
        grid=(B // bb,),
        in_specs=[
            pl.BlockSpec((bb, C, HW), lambda i: (i, 0, 0)),         # x
            pl.BlockSpec((C + C16, C), lambda i: (0, 0)),           # wcat
            pl.BlockSpec((C + C16, 1), lambda i: (0, 0)),           # bcat
            pl.BlockSpec((C, C16), lambda i: (0, 0)),               # w2
            pl.BlockSpec((C, 1), lambda i: (0, 0)),                 # b2
            pl.BlockSpec((9, C), lambda i: (0, 0)),                 # wc9
            pl.BlockSpec((9, HW), lambda i: (0, 0)),                # pre-rolled masks
            pl.BlockSpec((1, 1), lambda i: (0, 0),
                         memory_space=pltpu.SMEM),                  # conv bias
        ],
        out_specs=pl.BlockSpec((bb, C, HW), lambda i: (i, 0, 0)),
        compiler_params=pltpu.CompilerParams(
            dimension_semantics=("parallel",)),
    )(x3, wcat, bcat, w2, b2c, wc9, mpre, bcs)

    return out3.reshape(B, C, H, W)


# ------------------------------ reference ---------------------------------- #

def dual_attention_ref(x, params):
    we, be = params["we"], params["be"]
    w1, b1 = params["w1"], params["b1"]
    w2, b2 = params["w2"], params["b2"]
    wc, bc = params["wc"], params["bc"]

    pooled = x.mean(axis=(2, 3))                                   # (B, C)
    m = jax.nn.sigmoid(pooled @ we.T + be)                         # acrosome mask
    ca = jax.nn.sigmoid(jnp.maximum(pooled @ w1.T + b1, 0.0) @ w2.T + b2)
    cs = (ca * m)[:, :, None, None]                                # (B, C, 1, 1)

    ss = jax.lax.conv_general_dilated(
        x, wc, window_strides=(1, 1), padding="SAME",
        dimension_numbers=("NCHW", "OIHW", "NCHW"))
    ss = jax.nn.sigmoid(ss + bc.reshape(1, 1, 1, 1))               # (B, 1, H, W)
    return x * cs + x * ss


# -------------------------------- main -------------------------------------- #

if __name__ == "__main__":
    B, C, H, W = 2, 32, 16, 16      # in_dim = 32 so in_dim // 16 = 2
    C16 = C // 16

    key = jax.random.PRNGKey(0)
    kx, k0, k1, k2, k3 = jax.random.split(key, 5)

    x = jax.random.normal(kx, (B, C, H, W), dtype=jnp.float32)

    # Deterministic synthetic parameters in PyTorch (out, in[, kh, kw]) layout.
    params = {
        "we": 0.1 * jax.random.normal(k0, (C, C), jnp.float32),
        "be": 0.05 * jnp.ones((C,), jnp.float32),
        "w1": 0.1 * jax.random.normal(k1, (C16, C), jnp.float32),
        "b1": 0.02 * jnp.ones((C16,), jnp.float32),
        "w2": 0.1 * jax.random.normal(k2, (C, C16), jnp.float32),
        "b2": -0.03 * jnp.ones((C,), jnp.float32),
        "wc": 0.1 * jax.random.normal(k3, (1, C, 3, 3), jnp.float32),
        "bc": 0.01 * jnp.ones((1,), jnp.float32),
    }

    out = jax.block_until_ready(dual_attention(x, params))

    ref = dual_attention_ref(x, params)
    assert out.shape == (B, C, H, W)
    assert jnp.allclose(out, ref, rtol=1e-5, atol=1e-5), (
        float(jnp.max(jnp.abs(out - ref))))

    print("KERNEL_OK")
</pallas_src>

<mosaic_0001>
module attributes {stable_mosaic.version = 11 : i64} {
  func.func @_dual_attention_kernel(%arg0: i32, %arg1: memref<1x32x256xf32, #tpu.memory_space<vmem>>, %arg2: memref<34x32xf32, #tpu.memory_space<vmem>>, %arg3: memref<34x1xf32, #tpu.memory_space<vmem>>, %arg4: memref<32x2xf32, #tpu.memory_space<vmem>>, %arg5: memref<32x1xf32, #tpu.memory_space<vmem>>, %arg6: memref<9x32xf32, #tpu.memory_space<vmem>>, %arg7: memref<9x256xf32, #tpu.memory_space<vmem>>, %arg8: memref<1x1xf32, #tpu.memory_space<smem>>, %arg9: memref<1x32x256xf32, #tpu.memory_space<vmem>>) attributes {dimension_semantics = [#tpu.dimension_semantics<parallel>], iteration_bounds = array<i64: 2>, scalar_prefetch = 0 : i64, scratch_operands = 0 : i64, tpu.core_type = #tpu.core_type<tc>, window_params = [{transform_indices = @transform_0, window_bounds = array<i64: 1, 32, 256>}, {pipeline_mode = #tpu.pipeline_mode<synchronous>, transform_indices = @transform_1, window_bounds = array<i64: 34, 32>}, {pipeline_mode = #tpu.pipeline_mode<synchronous>, transform_indices = @transform_2, window_bounds = array<i64: 34, 1>}, {pipeline_mode = #tpu.pipeline_mode<synchronous>, transform_indices = @transform_3, window_bounds = array<i64: 32, 2>}, {pipeline_mode = #tpu.pipeline_mode<synchronous>, transform_indices = @transform_4, window_bounds = array<i64: 32, 1>}, {pipeline_mode = #tpu.pipeline_mode<synchronous>, transform_indices = @transform_5, window_bounds = array<i64: 9, 32>}, {pipeline_mode = #tpu.pipeline_mode<synchronous>, transform_indices = @transform_6, window_bounds = array<i64: 9, 256>}, {transform_indices = @transform_7, window_bounds = array<i64: 1, 1>}, {transform_indices = @transform_8, window_bounds = array<i64: 1, 32, 256>}]} {
    %c0 = arith.constant 0 : index
    %c0_0 = arith.constant 0 : index
    %c0_1 = arith.constant 0 : index
    %0 = vector.load %arg1[%c0, %c0_0, %c0_1] : memref<1x32x256xf32, #tpu.memory_space<vmem>>, vector<1x32x256xf32>
    %1 = vector.shape_cast %0 : vector<1x32x256xf32> to vector<32x256xf32>
    %cst = arith.constant dense<0.000000e+00> : vector<32xf32>
    %2 = vector.multi_reduction <add>, %1, %cst [1] : vector<32x256xf32> to vector<32xf32>
    %3 = vector.shape_cast %2 : vector<32xf32> to vector<32x1xf32>
    %cst_2 = arith.constant 2.560000e+02 : f32
    %4 = vector.broadcast %cst_2 : f32 to vector<32x1xf32>
    %5 = arith.divf %3, %4 : vector<32x1xf32>
    %c0_3 = arith.constant 0 : index
    %c0_4 = arith.constant 0 : index
    %6 = vector.load %arg2[%c0_3, %c0_4] : memref<34x32xf32, #tpu.memory_space<vmem>>, vector<34x32xf32>
    %cst_5 = arith.constant dense<0.000000e+00> : vector<34x1xf32>
    %7 = tpu.matmul %6, %5, %cst_5 {dimension_numbers = #tpu.dot_dimension_numbers<[1], [0], [0], [1], [0, 0, 1, 1], [], []>} : vector<34x32xf32>, vector<32x1xf32>, vector<34x1xf32> -> vector<34x1xf32>
    %c0_6 = arith.constant 0 : index
    %c0_7 = arith.constant 0 : index
    %8 = vector.load %arg3[%c0_6, %c0_7] : memref<34x1xf32, #tpu.memory_space<vmem>>, vector<34x1xf32>
    %9 = arith.addf %7, %8 : vector<34x1xf32>
    %10 = vector.extract_strided_slice %9 {offsets = [0, 0], sizes = [32, 1], strides = [1, 1]} : vector<34x1xf32> to vector<32x1xf32>
    %11 = arith.negf %10 : vector<32x1xf32>
    %12 = math.exp %11 : vector<32x1xf32>
    %cst_8 = arith.constant 1.000000e+00 : f32
    %13 = vector.broadcast %cst_8 : f32 to vector<32x1xf32>
    %14 = arith.addf %13, %12 : vector<32x1xf32>
    %15 = arith.divf %13, %14 : vector<32x1xf32>
    %16 = vector.extract_strided_slice %9 {offsets = [32, 0], sizes = [2, 1], strides = [1, 1]} : vector<34x1xf32> to vector<2x1xf32>
    %cst_9 = arith.constant 0.000000e+00 : f32
    %17 = vector.broadcast %cst_9 : f32 to vector<2x1xf32>
    %18 = arith.maximumf %16, %17 : vector<2x1xf32>
    %c0_10 = arith.constant 0 : index
    %c0_11 = arith.constant 0 : index
    %19 = vector.load %arg4[%c0_10, %c0_11] : memref<32x2xf32, #tpu.memory_space<vmem>>, vector<32x2xf32>
    %cst_12 = arith.constant dense<0.000000e+00> : vector<32x1xf32>
    %20 = tpu.matmul %19, %18, %cst_12 {dimension_numbers = #tpu.dot_dimension_numbers<[1], [0], [0], [1], [0, 0, 1, 1], [], []>} : vector<32x2xf32>, vector<2x1xf32>, vector<32x1xf32> -> vector<32x1xf32>
    %c0_13 = arith.constant 0 : index
    %c0_14 = arith.constant 0 : index
    %21 = vector.load %arg5[%c0_13, %c0_14] : memref<32x1xf32, #tpu.memory_space<vmem>>, vector<32x1xf32>
    %22 = arith.addf %20, %21 : vector<32x1xf32>
    %23 = arith.negf %22 : vector<32x1xf32>
    %24 = math.exp %23 : vector<32x1xf32>
    %cst_15 = arith.constant 1.000000e+00 : f32
    %25 = vector.broadcast %cst_15 : f32 to vector<32x1xf32>
    %26 = arith.addf %25, %24 : vector<32x1xf32>
    %27 = arith.divf %25, %26 : vector<32x1xf32>
    %28 = arith.mulf %27, %15 : vector<32x1xf32>
    %c0_16 = arith.constant 0 : index
    %c0_17 = arith.constant 0 : index
    %29 = vector.load %arg7[%c0_16, %c0_17] : memref<9x256xf32, #tpu.memory_space<vmem>>, vector<9x256xf32>
    %c0_18 = arith.constant 0 : index
    %c0_19 = arith.constant 0 : index
    %30 = vector.load %arg6[%c0_18, %c0_19] : memref<9x32xf32, #tpu.memory_space<vmem>>, vector<9x32xf32>
    %c0_20 = arith.constant 0 : index
    %c0_21 = arith.constant 0 : index
    %31 = memref.load %arg8[%c0_20, %c0_21] : memref<1x1xf32, #tpu.memory_space<smem>>
    %32 = vector.shape_cast %0 : vector<1x32x256xf32> to vector<32x256xf32>
    %cst_22 = arith.constant dense<0.000000e+00> : vector<9x256xf32>
    %33 = tpu.matmul %30, %32, %cst_22 {dimension_numbers = #tpu.dot_dimension_numbers<[1], [0], [0], [1], [0, 0, 1, 1], [], []>} : vector<9x32xf32>, vector<32x256xf32>, vector<9x256xf32> -> vector<9x256xf32>
    %34 = arith.mulf %33, %29 : vector<9x256xf32>
    %35 = vector.extract_strided_slice %34 {offsets = [0, 0], sizes = [1, 256], strides = [1, 1]} : vector<9x256xf32> to vector<1x256xf32>
    %c17_i32 = arith.constant 17 : i32
    %36 = tpu.dynamic_rotate %35 by %c17_i32 dim 1 : vector<1x256xf32>, i32 -> vector<1x256xf32>
    %37 = vector.broadcast %31 : f32 to vector<1x256xf32>
    %38 = arith.addf %36, %37 : vector<1x256xf32>
    %39 = vector.extract_strided_slice %34 {offsets = [1, 0], sizes = [1, 256], strides = [1, 1]} : vector<9x256xf32> to vector<1x256xf32>
    %c16_i32 = arith.constant 16 : i32
    %40 = tpu.dynamic_rotate %39 by %c16_i32 dim 1 : vector<1x256xf32>, i32 -> vector<1x256xf32>
    %41 = arith.addf %38, %40 : vector<1x256xf32>
    %42 = vector.extract_strided_slice %34 {offsets = [2, 0], sizes = [1, 256], strides = [1, 1]} : vector<9x256xf32> to vector<1x256xf32>
    %c15_i32 = arith.constant 15 : i32
    %43 = tpu.dynamic_rotate %42 by %c15_i32 dim 1 : vector<1x256xf32>, i32 -> vector<1x256xf32>
    %44 = arith.addf %41, %43 : vector<1x256xf32>
    %45 = vector.extract_strided_slice %34 {offsets = [3, 0], sizes = [1, 256], strides = [1, 1]} : vector<9x256xf32> to vector<1x256xf32>
    %c1_i32 = arith.constant 1 : i32
    %46 = tpu.dynamic_rotate %45 by %c1_i32 dim 1 : vector<1x256xf32>, i32 -> vector<1x256xf32>
    %47 = arith.addf %44, %46 : vector<1x256xf32>
    %48 = vector.extract_strided_slice %34 {offsets = [4, 0], sizes = [1, 256], strides = [1, 1]} : vector<9x256xf32> to vector<1x256xf32>
    %49 = arith.addf %47, %48 : vector<1x256xf32>
    %50 = vector.extract_strided_slice %34 {offsets = [5, 0], sizes = [1, 256], strides = [1, 1]} : vector<9x256xf32> to vector<1x256xf32>
    %c255_i32 = arith.constant 255 : i32
    %51 = tpu.dynamic_rotate %50 by %c255_i32 dim 1 : vector<1x256xf32>, i32 -> vector<1x256xf32>
    %52 = arith.addf %49, %51 : vector<1x256xf32>
    %53 = vector.extract_strided_slice %34 {offsets = [6, 0], sizes = [1, 256], strides = [1, 1]} : vector<9x256xf32> to vector<1x256xf32>
    %c241_i32 = arith.constant 241 : i32
    %54 = tpu.dynamic_rotate %53 by %c241_i32 dim 1 : vector<1x256xf32>, i32 -> vector<1x256xf32>
    %55 = arith.addf %52, %54 : vector<1x256xf32>
    %56 = vector.extract_strided_slice %34 {offsets = [7, 0], sizes = [1, 256], strides = [1, 1]} : vector<9x256xf32> to vector<1x256xf32>
    %c240_i32 = arith.constant 240 : i32
    %57 = tpu.dynamic_rotate %56 by %c240_i32 dim 1 : vector<1x256xf32>, i32 -> vector<1x256xf32>
    %58 = arith.addf %55, %57 : vector<1x256xf32>
    %59 = vector.extract_strided_slice %34 {offsets = [8, 0], sizes = [1, 256], strides = [1, 1]} : vector<9x256xf32> to vector<1x256xf32>
    %c239_i32 = arith.constant 239 : i32
    %60 = tpu.dynamic_rotate %59 by %c239_i32 dim 1 : vector<1x256xf32>, i32 -> vector<1x256xf32>
    %61 = arith.addf %58, %60 : vector<1x256xf32>
    %62 = arith.negf %61 : vector<1x256xf32>
    %63 = math.exp %62 : vector<1x256xf32>
    %cst_23 = arith.constant 1.000000e+00 : f32
    %64 = vector.broadcast %cst_23 : f32 to vector<1x256xf32>
    %65 = arith.addf %64, %63 : vector<1x256xf32>
    %66 = arith.divf %64, %65 : vector<1x256xf32>
    %67 = vector.broadcast %28 : vector<32x1xf32> to vector<32x256xf32>
    %68 = vector.broadcast %66 : vector<1x256xf32> to vector<32x256xf32>
    %69 = arith.addf %67, %68 : vector<32x256xf32>
    %70 = arith.mulf %32, %69 : vector<32x256xf32>
    %c0_24 = arith.constant 0 : index
    %c0_25 = arith.constant 0 : index
    %c0_26 = arith.constant 0 : index
    %71 = vector.load %arg9[%c0_24, %c0_25, %c0_26] : memref<1x32x256xf32, #tpu.memory_space<vmem>>, vector<1x32x256xf32>
    %72 = vector.shape_cast %71 : vector<1x32x256xf32> to vector<32x256xf32>
    %73 = vector.shape_cast %70 : vector<32x256xf32> to vector<1x32x256xf32>
    tpu.vector_store %arg9[%c0_24, %c0_25, %c0_26], %73 {strides = array<i32>} : memref<1x32x256xf32, #tpu.memory_space<vmem>>, vector<1x32x256xf32>,
    return
  }
  func.func @transform_0(%arg0: i32) -> (i32, i32, i32) {
    %c0_i32 = arith.constant 0 : i32
    %c0_i32_0 = arith.constant 0 : i32
    %c0_i32_1 = arith.constant 0 : i32
    return %arg0, %c0_i32, %c0_i32_0 : i32, i32, i32
  }
  func.func @transform_1(%arg0: i32) -> (i32, i32) {
    %c0_i32 = arith.constant 0 : i32
    %c0_i32_0 = arith.constant 0 : i32
    %c0_i32_1 = arith.constant 0 : i32
    return %c0_i32, %c0_i32_0 : i32, i32
  }
  func.func @transform_2(%arg0: i32) -> (i32, i32) {
    %c0_i32 = arith.constant 0 : i32
    %c0_i32_0 = arith.constant 0 : i32
    %c0_i32_1 = arith.constant 0 : i32
    return %c0_i32, %c0_i32_0 : i32, i32
  }
  func.func @transform_3(%arg0: i32) -> (i32, i32) {
    %c0_i32 = arith.constant 0 : i32
    %c0_i32_0 = arith.constant 0 : i32
    %c0_i32_1 = arith.constant 0 : i32
    return %c0_i32, %c0_i32_0 : i32, i32
  }
  func.func @transform_4(%arg0: i32) -> (i32, i32) {
    %c0_i32 = arith.constant 0 : i32
    %c0_i32_0 = arith.constant 0 : i32
    %c0_i32_1 = arith.constant 0 : i32
    return %c0_i32, %c0_i32_0 : i32, i32
  }
  func.func @transform_5(%arg0: i32) -> (i32, i32) {
    %c0_i32 = arith.constant 0 : i32
    %c0_i32_0 = arith.constant 0 : i32
    %c0_i32_1 = arith.constant 0 : i32
    return %c0_i32, %c0_i32_0 : i32, i32
  }
  func.func @transform_6(%arg0: i32) -> (i32, i32) {
    %c0_i32 = arith.constant 0 : i32
    %c0_i32_0 = arith.constant 0 : i32
    %c0_i32_1 = arith.constant 0 : i32
    return %c0_i32, %c0_i32_0 : i32, i32
  }
  func.func @transform_7(%arg0: i32) -> (i32, i32) {
    %c0_i32 = arith.constant 0 : i32
    %c0_i32_0 = arith.constant 0 : i32
    %c0_i32_1 = arith.constant 0 : i32
    return %c0_i32, %c0_i32_0 : i32, i32
  }
  func.func @transform_8(%arg0: i32) -> (i32, i32, i32) {
    %c0_i32 = arith.constant 0 : i32
    %c0_i32_0 = arith.constant 0 : i32
    %c0_i32_1 = arith.constant 0 : i32
    return %arg0, %c0_i32, %c0_i32_0 : i32, i32, i32
  }
}

</mosaic_0001>

<llo_original>
// kernel: tpu_custom_call.1
$region0: #{tpu_custom_call.1}
  #allocation0 [shape = 'u32[]', space=smem, size = 0x4, offset = 0x4, fixed_abs, tag = 'smem constant byte address 0x4 - core index']
  #allocation1 [shape = 'u32[72,128]{1,0:T(1,128)}', space=vmem, size = 0x9000, scoped, tag = 'internal scratch']
  #allocation2 [shape = 'f32[1,1]{1,0:T(1,128)S(6)}', space=smem, size = 0x200, scoped, tag = 'scoped memory for tpu_custom_call.1']
  %s0 = inlined_call_operand.hbm [shape: f32[2,32,256], index: 0, kind: input, shape index: {}]
  %s1 = inlined_call_operand.vmem [shape: f32[34,32], index: 1, kind: input, shape index: {}]
  %s2 = inlined_call_operand.vmem [shape: f32[34,1], index: 2, kind: input, shape index: {}]
  %s3 = inlined_call_operand.vmem [shape: f32[32,2], index: 3, kind: input, shape index: {}]
  %s4 = inlined_call_operand.vmem [shape: f32[32,1], index: 4, kind: input, shape index: {}]
  %s5 = inlined_call_operand.vmem [shape: f32[9,32], index: 5, kind: input, shape index: {}]
  %s6 = inlined_call_operand.vmem [shape: f32[9,256], index: 6, kind: input, shape index: {}]
  %s7 = inlined_call_operand.<no memory space> [shape: f32[1,1], index: 7, kind: input, shape index: {}]
  %s8 = inlined_call_operand.hbm [shape: f32[2,32,256], index: 8, kind: output, shape index: {}]
  %s9 = sld [smem:[#allocation0]]
  $region69: #{tpu_custom_call.1} parent=0
    _
  %s11 = ssub.s32 1, %s9
  %s12 = scalar_select 0, %s11, %s9
  %13 = sst [smem:[#allocation2]] %s7
  $region1: #{tpu_custom_call.1} parent=0
    #allocation3 [shape = 'u8[65536]{0}', space=vmem, size = 0x10000, scoped, tag = 'input window, operand 0']
    #allocation4 [shape = 's32[2]{0}', space=sflag, size = 0x8, scoped, tag = 'scoped memory for tpu_custom_call.1']
    #allocation5 [shape = 's32[2]{0}', space=sflag, size = 0x8, scoped, tag = 'scoped memory for tpu_custom_call.1']
    #allocation6 [shape = 'u8[65536]{0}', space=vmem, size = 0x10000, scoped, tag = 'output window, operand 0']
    %14 = vsyncpa [#allocation4], 0
    %s15 = scalar_lea.sflag [#allocation4], 1
    %16 = vsyncpa %s15, 0
    %17 = vsyncpa [#allocation5], 0
    %s18 = scalar_lea.sflag [#allocation5], 1
    %19 = vsyncpa %s18, 0
    loop: start=0, step=1, limit=4
    $region2: #{tpu_custom_call.1} parent=1 // loop_pre_header
      _
    $region3: #{tpu_custom_call.1} parent=1 // loop_header
      %s21 = sphi 0, %s25
      %p22 = scmp.ge.s32.totalorder %s21, 4
      %s31 = sphi 0, %s33
      %s34 = sphi 0, %s31
      %s35 = sphi 0, %s34
      %s51 = sphi 0, %s35
      %s55 = sphi 0, %s55
      %s57 = sphi 0, %s55
      %s58 = sphi 0, %s57
      %s72 = sphi 0, %s58
      %s76 = sphi 0, %s76
      %s78 = sphi 0, %s76
      %s79 = sphi 0, %s78
      %s93 = sphi 0, %s79
      %s97 = sphi 0, %s97
      %s99 = sphi 0, %s97
      %s100 = sphi 0, %s99
      %s114 = sphi 0, %s100
      %s118 = sphi 0, %s118
      %s120 = sphi 0, %s118
      %s121 = sphi 0, %s120
      %s135 = sphi 0, %s121
      %s139 = sphi 0, %s139
      %s141 = sphi 0, %s139
      %s142 = sphi 0, %s141
      %s156 = sphi 0, %s142
      %s160 = sphi 0, %s160
      %s162 = sphi 0, %s160
      %s163 = sphi 0, %s162
      %s177 = sphi 0, %s163
      %s181 = sphi 0, %s181
      %s183 = sphi 0, %s181
      %s184 = sphi 0, %s183
      %s198 = sphi 0, %s184
      %s204 = sphi 0, %s206
      %s207 = sphi 0, %s204
      %s208 = sphi 0, %s207
      %s224 = sphi 0, %s208
    $region4: #{tpu_custom_call.1} parent=1 // loop_header_branch
      %24 = sbr.rel (%p22) target = $region8
    $region5: #{tpu_custom_call.1} parent=1 // loop_body
      %s26 = ssub.s32 %s21, 1
      %s27 = ssub.s32 %s21, 2
      %s28 = sadd.s32 %s21, 1
      %s29 = ssub.s32 %s21, %s28
      %p30 = scmp.eq.s32.totalorder %s29, 0
      %s32 = sadd.s32 %s31, 1
      %s33 = scalar_select %p30, %s31, %s32
      %p36 = pneg %p30
      %p37 = scmp.eq.s32.totalorder %s21, 1
      %p38 = por %p36, %p37
      %p39 = scmp.ne.s32.totalorder %s31, %s34
      %p40 = scmp.eq.s32.totalorder %s21, 0
      %p41 = por %p39, %p40
      %p42 = scmp.ne.s32.totalorder %s31, %s34
      %p43 = scmp.eq.s32.totalorder %s26, 1
      %p44 = por %p42, %p43
      %p45 = scmp.ne.s32.totalorder %s34, %s35
      %p46 = scmp.eq.s32.totalorder %s26, 0
      %p47 = por %p45, %p46
      %p48 = scmp.ne.s32.totalorder %s34, %s35
      %p49 = scmp.eq.s32.totalorder %s27, 1
      %p50 = por %p48, %p49
      %p52 = scmp.ne.s32.totalorder %s35, %s51
      %p53 = scmp.eq.s32.totalorder %s27, 0
      %p54 = por %p52, %p53
      %s56 = sadd.s32 %s55, 1
      %p59 = scmp.eq.s32.totalorder %s21, 1
      %p60 = scmp.ne.s32.totalorder %s55, %s57
      %p61 = scmp.eq.s32.totalorder %s21, 0
      %p62 = por %p60, %p61
      %p63 = scmp.ne.s32.totalorder %s55, %s57
      %p64 = scmp.eq.s32.totalorder %s26, 1
      %p65 = por %p63, %p64
      %p66 = scmp.ne.s32.totalorder %s57, %s58
      %p67 = scmp.eq.s32.totalorder %s26, 0
      %p68 = por %p66, %p67
      %p69 = scmp.ne.s32.totalorder %s57, %s58
      %p70 = scmp.eq.s32.totalorder %s27, 1
      %p71 = por %p69, %p70
      %p73 = scmp.ne.s32.totalorder %s58, %s72
      %p74 = scmp.eq.s32.totalorder %s27, 0
      %p75 = por %p73, %p74
      %s77 = sadd.s32 %s76, 1
      %p80 = scmp.eq.s32.totalorder %s21, 1
      %p81 = scmp.ne.s32.totalorder %s76, %s78
      %p82 = scmp.eq.s32.totalorder %s21, 0
      %p83 = por %p81, %p82
      %p84 = scmp.ne.s32.totalorder %s76, %s78
      %p85 = scmp.eq.s32.totalorder %s26, 1
      %p86 = por %p84, %p85
      %p87 = scmp.ne.s32.totalorder %s78, %s79
      %p88 = scmp.eq.s32.totalorder %s26, 0
      %p89 = por %p87, %p88
      %p90 = scmp.ne.s32.totalorder %s78, %s79
      %p91 = scmp.eq.s32.totalorder %s27, 1
      %p92 = por %p90, %p91
      %p94 = scmp.ne.s32.totalorder %s79, %s93
      %p95 = scmp.eq.s32.totalorder %s27, 0
      %p96 = por %p94, %p95
      %s98 = sadd.s32 %s97, 1
      %p101 = scmp.eq.s32.totalorder %s21, 1
      %p102 = scmp.ne.s32.totalorder %s97, %s99
      %p103 = scmp.eq.s32.totalorder %s21, 0
      %p104 = por %p102, %p103
      %p105 = scmp.ne.s32.totalorder %s97, %s99
      %p106 = scmp.eq.s32.totalorder %s26, 1
      %p107 = por %p105, %p106
      %p108 = scmp.ne.s32.totalorder %s99, %s100
      %p109 = scmp.eq.s32.totalorder %s26, 0
      %p110 = por %p108, %p109
      %p111 = scmp.ne.s32.totalorder %s99, %s100
      %p112 = scmp.eq.s32.totalorder %s27, 1
      %p113 = por %p111, %p112
      %p115 = scmp.ne.s32.totalorder %s100, %s114
      %p116 = scmp.eq.s32.totalorder %s27, 0
      %p117 = por %p115, %p116
      %s119 = sadd.s32 %s118, 1
      %p122 = scmp.eq.s32.totalorder %s21, 1
      %p123 = scmp.ne.s32.totalorder %s118, %s120
      %p124 = scmp.eq.s32.totalorder %s21, 0
      %p125 = por %p123, %p124
      %p126 = scmp.ne.s32.totalorder %s118, %s120
      %p127 = scmp.eq.s32.totalorder %s26, 1
      %p128 = por %p126, %p127
      %p129 = scmp.ne.s32.totalorder %s120, %s121
      %p130 = scmp.eq.s32.totalorder %s26, 0
      %p131 = por %p129, %p130
      %p132 = scmp.ne.s32.totalorder %s120, %s121
      %p133 = scmp.eq.s32.totalorder %s27, 1
      %p134 = por %p132, %p133
      %p136 = scmp.ne.s32.totalorder %s121, %s135
      %p137 = scmp.eq.s32.totalorder %s27, 0
      %p138 = por %p136, %p137
      %s140 = sadd.s32 %s139, 1
      %p143 = scmp.eq.s32.totalorder %s21, 1
      %p144 = scmp.ne.s32.totalorder %s139, %s141
      %p145 = scmp.eq.s32.totalorder %s21, 0
      %p146 = por %p144, %p145
      %p147 = scmp.ne.s32.totalorder %s139, %s141
      %p148 = scmp.eq.s32.totalorder %s26, 1
      %p149 = por %p147, %p148
      %p150 = scmp.ne.s32.totalorder %s141, %s142
      %p151 = scmp.eq.s32.totalorder %s26, 0
      %p152 = por %p150, %p151
      %p153 = scmp.ne.s32.totalorder %s141, %s142
      %p154 = scmp.eq.s32.totalorder %s27, 1
      %p155 = por %p153, %p154
      %p157 = scmp.ne.s32.totalorder %s142, %s156
      %p158 = scmp.eq.s32.totalorder %s27, 0
      %p159 = por %p157, %p158
      %s161 = sadd.s32 %s160, 1
      %p164 = scmp.eq.s32.totalorder %s21, 1
      %p165 = scmp.ne.s32.totalorder %s160, %s162
      %p166 = scmp.eq.s32.totalorder %s21, 0
      %p167 = por %p165, %p166
      %p168 = scmp.ne.s32.totalorder %s160, %s162
      %p169 = scmp.eq.s32.totalorder %s26, 1
      %p170 = por %p168, %p169
      %p171 = scmp.ne.s32.totalorder %s162, %s163
      %p172 = scmp.eq.s32.totalorder %s26, 0
      %p173 = por %p171, %p172
      %p174 = scmp.ne.s32.totalorder %s162, %s163
      %p175 = scmp.eq.s32.totalorder %s27, 1
      %p176 = por %p174, %p175
      %p178 = scmp.ne.s32.totalorder %s163, %s177
      %p179 = scmp.eq.s32.totalorder %s27, 0
      %p180 = por %p178, %p179
      %s182 = sadd.s32 %s181, 1
      %p185 = scmp.eq.s32.totalorder %s21, 1
      %p186 = scmp.ne.s32.totalorder %s181, %s183
      %p187 = scmp.eq.s32.totalorder %s21, 0
      %p188 = por %p186, %p187
      %p189 = scmp.ne.s32.totalorder %s181, %s183
      %p190 = scmp.eq.s32.totalorder %s26, 1
      %p191 = por %p189, %p190
      %p192 = scmp.ne.s32.totalorder %s183, %s184
      %p193 = scmp.eq.s32.totalorder %s26, 0
      %p194 = por %p192, %p193
      %p195 = scmp.ne.s32.totalorder %s183, %s184
      %p196 = scmp.eq.s32.totalorder %s27, 1
      %p197 = por %p195, %p196
      %p199 = scmp.ne.s32.totalorder %s184, %s198
      %p200 = scmp.eq.s32.totalorder %s27, 0
      %p201 = por %p199, %p200
      %s202 = ssub.s32 %s21, %s28
      %p203 = scmp.eq.s32.totalorder %s202, 0
      %s205 = sadd.s32 %s204, 1
      %s206 = scalar_select %p203, %s204, %s205
      %p209 = pneg %p203
      %p210 = scmp.eq.s32.totalorder %s21, 1
      %p211 = por %p209, %p210
      %p212 = scmp.ne.s32.totalorder %s204, %s207
      %p213 = scmp.eq.s32.totalorder %s21, 0
      %p214 = por %p212, %p213
      %p215 = scmp.ne.s32.totalorder %s204, %s207
      %p216 = scmp.eq.s32.totalorder %s26, 1
      %p217 = por %p215, %p216
      %p218 = scmp.ne.s32.totalorder %s207, %s208
      %p219 = scmp.eq.s32.totalorder %s26, 0
      %p220 = por %p218, %p219
      %p221 = scmp.ne.s32.totalorder %s207, %s208
      %p222 = scmp.eq.s32.totalorder %s27, 1
      %p223 = por %p221, %p222
      %p225 = scmp.ne.s32.totalorder %s208, %s224
      %p226 = scmp.eq.s32.totalorder %s27, 0
      %p227 = por %p225, %p226
      %p228 = scmp.le.s32.totalorder 1, %s21
      %p229 = scmp.lt.s32.totalorder %s21, 3
      %p230 = pnand %p228, %p229
      %p231 = pneg %p230
      // Predicated region
      $region9: #{tpu_custom_call.1} parent=5 // pred_check
        _
      $region10: #{tpu_custom_call.1} parent=5 // pred_check_branch
        %233 = sbr.rel (%p230) target = $region12
      $region11: #{tpu_custom_call.1} parent=5 // pred_region
        %s234 = ssub.s32 %s21, 1
        // Predicated region
        $region13: #{tpu_custom_call.1} parent=11 // pred_check
          %p235 = pneg %p68
        $region14: #{tpu_custom_call.1} parent=11 // pred_check_branch
          %237 = sbr.rel (%p235) target = $region16
        $region15: #{tpu_custom_call.1} parent=11 // pred_region
          _
        $region16: #{tpu_custom_call.1} parent=11 // pred_fallthru
          _
        // Predicated region
        $region17: #{tpu_custom_call.1} parent=11 // pred_check
          %p238 = pneg %p89
        $region18: #{tpu_custom_call.1} parent=11 // pred_check_branch
          %240 = sbr.rel (%p238) target = $region20
        $region19: #{tpu_custom_call.1} parent=11 // pred_region
          _
        $region20: #{tpu_custom_call.1} parent=11 // pred_fallthru
          _
        // Predicated region
        $region21: #{tpu_custom_call.1} parent=11 // pred_check
          %p241 = pneg %p110
        $region22: #{tpu_custom_call.1} parent=11 // pred_check_branch
          %243 = sbr.rel (%p241) target = $region24
        $region23: #{tpu_custom_call.1} parent=11 // pred_region
          _
        $region24: #{tpu_custom_call.1} parent=11 // pred_fallthru
          _
        // Predicated region
        $region25: #{tpu_custom_call.1} parent=11 // pred_check
          %p244 = pneg %p131
        $region26: #{tpu_custom_call.1} parent=11 // pred_check_branch
          %246 = sbr.rel (%p244) target = $region28
        $region27: #{tpu_custom_call.1} parent=11 // pred_region
          _
        $region28: #{tpu_custom_call.1} parent=11 // pred_fallthru
          _
        // Predicated region
        $region29: #{tpu_custom_call.1} parent=11 // pred_check
          %p247 = pneg %p152
        $region30: #{tpu_custom_call.1} parent=11 // pred_check_branch
          %249 = sbr.rel (%p247) target = $region32
        $region31: #{tpu_custom_call.1} parent=11 // pred_region
          _
        $region32: #{tpu_custom_call.1} parent=11 // pred_fallthru
          _
        // Predicated region
        $region33: #{tpu_custom_call.1} parent=11 // pred_check
          %p250 = pneg %p173
        $region34: #{tpu_custom_call.1} parent=11 // pred_check_branch
          %252 = sbr.rel (%p250) target = $region36
        $region35: #{tpu_custom_call.1} parent=11 // pred_region
          _
        $region36: #{tpu_custom_call.1} parent=11 // pred_fallthru
          _
        // Predicated region
        $region37: #{tpu_custom_call.1} parent=11 // pred_check
          %p253 = pneg %p194
        $region38: #{tpu_custom_call.1} parent=11 // pred_check_branch
          %255 = sbr.rel (%p253) target = $region40
        $region39: #{tpu_custom_call.1} parent=11 // pred_region
          _
        $region40: #{tpu_custom_call.1} parent=11 // pred_fallthru
          _
      $region12: #{tpu_custom_call.1} parent=5 // pred_fallthru
        _
      %p256 = scmp.lt.s32.totalorder %s21, 2
      // Predicated region
      $region41: #{tpu_custom_call.1} parent=5 // pred_check
        %p257 = pneg %p256
      $region42: #{tpu_custom_call.1} parent=5 // pred_check_branch
        %259 = sbr.rel (%p257) target = $region44
      $region43: #{tpu_custom_call.1} parent=5 // pred_region
        // Predicated region
        $region45: #{tpu_custom_call.1} parent=43 // pred_check
          %p260 = pneg %p41
        $region46: #{tpu_custom_call.1} parent=43 // pred_check_branch
          %262 = sbr.rel (%p260) target = $region48
        $region47: #{tpu_custom_call.1} parent=43 // pred_region
          %s263 = sand.u32 %s31, 1
          %s264 = scalar_lea.sflag [#allocation4], %s263
          %s265 = sand.u32 %s31, 1
          %s266 = smul.addr %s265, 64
          %s267 = scalar_lea.vmem [#allocation3], %s266
          %269 = vsyncadd %s264, 0
          %s270 = smul.addr %s21, 8
          %s271 = smul.addr %s270, 8
          %s272 = scalar_lea.hbm %s0, %s271
          %s273 = sshll.u32 %s272, 4
          %s274 = int_to_ptr.hbm [resolvable:$true] %s273
          %s275 = sshll.u32 %s267, 4
          %s276 = int_to_ptr.vmem [resolvable:$true] %s275
          %281 = dma.hbm_to_vmem [thread:$0]  %s274, 1024, %s276, %s264, 256, 256, 16
        $region48: #{tpu_custom_call.1} parent=43 // pred_fallthru
          _
      $region44: #{tpu_custom_call.1} parent=5 // pred_fallthru
        _
      %p282 = scmp.le.s32.totalorder 1, %s21
      %p283 = scmp.lt.s32.totalorder %s21, 3
      %p284 = pnand %p282, %p283
      %p285 = pneg %p284
      // Predicated region
      $region49: #{tpu_custom_call.1} parent=5 // pred_check
        _
      $region50: #{tpu_custom_call.1} parent=5 // pred_check_branch
        %287 = sbr.rel (%p284) target = $region52
      $region51: #{tpu_custom_call.1} parent=5 // pred_region
        %s288 = ssub.s32 %s21, 1
        %s289 = sand.u32 %s34, 1
        %s290 = scalar_lea.sflag [#allocation4], %s289
        %s291 = sand.u32 %s34, 1
        %s292 = smul.addr %s291, 64
        %s293 = scalar_lea.vmem [#allocation3], %s292
        // Predicated region
        $region53: #{tpu_custom_call.1} parent=51 // pred_check
          %p294 = pneg %p47
        $region54: #{tpu_custom_call.1} parent=51 // pred_check_branch
          %296 = sbr.rel (%p294) target = $region56
        $region55: #{tpu_custom_call.1} parent=51 // pred_region
          %298 = dma.done %s290, 1024
        $region56: #{tpu_custom_call.1} parent=51 // pred_fallthru
          _
        %s299 = sand.u32 %s34, 1
        %s300 = scalar_lea.sflag [#allocation4], %s299
        %s301 = sand.u32 %s34, 1
        %s302 = smul.addr %s301, 64
        %s303 = scalar_lea.vmem [#allocation3], %s302
        %p304 = pneg %p47
        %p305 = pneg %p44
        %p306 = pneg %p68
        %p307 = pneg %p65
        %p308 = pneg %p89
        %p309 = pneg %p86
        %p310 = pneg %p110
        %p311 = pneg %p107
        %p312 = pneg %p131
        %p313 = pneg %p128
        %p314 = pneg %p152
        %p315 = pneg %p149
        %p316 = pneg %p173
        %p317 = pneg %p170
        %p318 = pneg %p194
        %p319 = pneg %p191
        %p320 = pneg %p220
        %p321 = pneg %p217
        %s322 = sand.u32 %s207, 1
        %s323 = scalar_lea.sflag [#allocation5], %s322
        %s324 = sand.u32 %s207, 1
        %s325 = smul.addr %s324, 64
        %s326 = scalar_lea.vmem [#allocation6], %s325
        %v327 = vld [vmem:[%s293] sm:$0xff]
        %v328 = vld [vmem:[%s293 + $0x8] sm:$0xff]
        %v329 = vld [vmem:[%s293 + $0x10] sm:$0xff]
        %v330 = vld [vmem:[%s293 + $0x18] sm:$0xff]
        %v331 = vld [vmem:[%s293 + $0x20] sm:$0xff]
        %v332 = vld [vmem:[%s293 + $0x28] sm:$0xff]
        %v333 = vld [vmem:[%s293 + $0x30] sm:$0xff]
        %v334 = vld [vmem:[%s293 + $0x38] sm:$0xff]
        %v335 = vadd.f32 %v327, %v328
        %336 = vadd.xlane.f32.xlu0 %v335
        %v337 = vpop.xlane.xlu0 %336
        %v338 = vadd.f32 %v329, %v330
        %339 = vadd.xlane.f32.xlu0 %v338
        %v340 = vpop.xlane.xlu0 %339
        %v341 = vadd.f32 %v331, %v332
        %342 = vadd.xlane.f32.xlu0 %v341
        %v343 = vpop.xlane.xlu0 %342
        %v344 = vadd.f32 %v333, %v334
        %345 = vadd.xlane.f32.xlu0 %v344
        %v346 = vpop.xlane.xlu0 %345
        %v347 = vrcp.pop 256.0
        %v348 = vmul.f32 256.0, %v347
        %v349 = vsub.f32 1.0, %v348
        %v350 = vmul.f32 %v347, %v349
        %v351 = vadd.f32 %v347, %v350
        %vm352 = vweird.f32 %v347
        %v353 = vsel %vm352, %v347, %v351
        %v354 = vmul.f32 %v337, %v353
        %v355 = vmul.f32 %v340, %v353
        %v356 = vmul.f32 %v343, %v353
        %v357 = vmul.f32 %v346, %v353
        %v358 = vld [vmem:[%s1] sm:$0xff]
        %v359 = vld [vmem:[%s1 + $0x8] sm:$0xff]
        %v360 = vld [vmem:[%s1 + $0x10] sm:$0xff]
        %v361 = vld [vmem:[%s1 + $0x18] sm:$0xff]
        %v362 = vld [vmem:[%s1 + $0x20] sm:$0x3]
        %v363 = vld [vmem:[%s2] sm:$0xff]
        %v364 = vld [vmem:[%s2 + $0x8] sm:$0xff]
        %v365 = vld [vmem:[%s2 + $0x10] sm:$0xff]
        %v366 = vld [vmem:[%s2 + $0x18] sm:$0xff]
        %v367 = vld [vmem:[%s2 + $0x20] sm:$0x3]
        %vm368 = vcmask 261120
        %v370 = vsel %vm368, %v358, 0
        %v373 = vsel %vm368, %v359, 0
        %v376 = vsel %vm368, %v360, 0
        %v379 = vsel %vm368, %v361, 0
        %v382 = vsel %vm368, %v362, 0
        %384 = vmatpush.msra.mxu0 0.0
        %385 = vmatpush.msra.mxu0 0.0
        %386 = vmatpush.msra.mxu0 0.0
        %387 = vmatpush.msra.mxu0 0.0
        %388 = vmatpush.msra.mxu0 0.0
        %389 = vmatpush.msra.mxu0 0.0
        %390 = vmatpush.msra.mxu0 0.0
        %391 = vmatpush.msra.mxu0 0.0
        %392 = vmatpush.msra.mxu0 0.0
        %393 = vmatpush.msra.mxu0 0.0
        %394 = vmatpush.msra.mxu0 0.0
        %395 = vmatpush.msra.mxu0 0.0
        %396 = vmatpush.msra.mxu0 %v357
        %397 = vmatpush.msra.mxu0 %v356
        %398 = vmatpush.msra.mxu0 %v355
        %399 = vmatpush.msra.mxu0 %v354
        %400 = vmatmul.f32.gmra.mxu0 %v370
        %v401 = vpop.f32.mrf.mxu0
        %v402 = vadd.f32 %v363, %v401
        %403 = vmatmul.f32.gmra.mxu0 %v373
        %v404 = vpop.f32.mrf.mxu0
        %v405 = vadd.f32 %v364, %v404
        %406 = vmatmul.f32.gmra.mxu0 %v376
        %v407 = vpop.f32.mrf.mxu0
        %v408 = vadd.f32 %v365, %v407
        %409 = vmatmul.f32.gmra.mxu0 %v379
        %v410 = vpop.f32.mrf.mxu0
        %v411 = vadd.f32 %v366, %v410
        %412 = vmatmul.f32.gmra.mxu0 %v382
        %v413 = vpop.f32.mrf.mxu0
        %v414 = vadd.f32 %v367, %v413
        %415 = vdwg.mxu0
        %v416 = vxor.u32 %v402, 2147483648
        %v417 = vxor.u32 %v405, 2147483648
        %v418 = vxor.u32 %v408, 2147483648
        %v419 = vxor.u32 %v411, 2147483648
        %v420 = vmul.f32 %v416, 1.442695
        %v421 = vpow.pop %v420
        %v422 = vmul.f32 %v417, 1.442695
        %v423 = vpow.pop %v422
        %v424 = vmul.f32 %v418, 1.442695
        %v425 = vpow.pop %v424
        %v426 = vmul.f32 %v419, 1.442695
        %v427 = vpow.pop %v426
        %v428 = vadd.f32 %v421, 1.0
        %v429 = vadd.f32 %v423, 1.0
        %v430 = vadd.f32 %v425, 1.0
        %v431 = vadd.f32 %v427, 1.0
        %v432 = vrcp.pop %v428
        %v433 = vmul.f32 %v428, %v432
        %v434 = vsub.f32 1.0, %v433
        %v435 = vmul.f32 %v432, %v434
        %v436 = vadd.f32 %v432, %v435
        %vm437 = vweird.f32 %v428
        %vm438 = vweird.f32 %v432
        %vm439 = vmor %vm437, %vm438
        %v440 = vsel %vm439, %v432, %v436
        %v441 = vand.u32 2147483647, %v428
        %vm442 = vcmp.eq.f32.partialorder %v441, 8.507059e+37
        %v443 = vand.u32 %v428, 2147483648
        %v444 = vor.u32 1.1754944e-38, %v443
        %v445 = vsel %vm442, %v444, %v440
        %v446 = vmul.f32 1.0, %v445
        %v447 = vrcp.pop %v429
        %v448 = vmul.f32 %v429, %v447
        %v449 = vsub.f32 1.0, %v448
        %v450 = vmul.f32 %v447, %v449
        %v451 = vadd.f32 %v447, %v450
        %vm452 = vweird.f32 %v429
        %vm453 = vweird.f32 %v447
        %vm454 = vmor %vm452, %vm453
        %v455 = vsel %vm454, %v447, %v451
        %v456 = vand.u32 2147483647, %v429
        %vm457 = vcmp.eq.f32.partialorder %v456, 8.507059e+37
        %v458 = vand.u32 %v429, 2147483648
        %v459 = vor.u32 1.1754944e-38, %v458
        %v460 = vsel %vm457, %v459, %v455
        %v461 = vmul.f32 1.0, %v460
        %v462 = vrcp.pop %v430
        %v463 = vmul.f32 %v430, %v462
        %v464 = vsub.f32 1.0, %v463
        %v465 = vmul.f32 %v462, %v464
        %v466 = vadd.f32 %v462, %v465
        %vm467 = vweird.f32 %v430
        %vm468 = vweird.f32 %v462
        %vm469 = vmor %vm467, %vm468
        %v470 = vsel %vm469, %v462, %v466
        %v471 = vand.u32 2147483647, %v430
        %vm472 = vcmp.eq.f32.partialorder %v471, 8.507059e+37
        %v473 = vand.u32 %v430, 2147483648
        %v474 = vor.u32 1.1754944e-38, %v473
        %v475 = vsel %vm472, %v474, %v470
        %v476 = vmul.f32 1.0, %v475
        %v477 = vrcp.pop %v431
        %v478 = vmul.f32 %v431, %v477
        %v479 = vsub.f32 1.0, %v478
        %v480 = vmul.f32 %v477, %v479
        %v481 = vadd.f32 %v477, %v480
        %vm482 = vweird.f32 %v431
        %vm483 = vweird.f32 %v477
        %vm484 = vmor %vm482, %vm483
        %v485 = vsel %vm484, %v477, %v481
        %v486 = vand.u32 2147483647, %v431
        %vm487 = vcmp.eq.f32.partialorder %v486, 8.507059e+37
        %v488 = vand.u32 %v431, 2147483648
        %v489 = vor.u32 1.1754944e-38, %v488
        %v490 = vsel %vm487, %v489, %v485
        %v491 = vmul.f32 1.0, %v490
        %v492 = vmax.f32 %v414, 0.0
        %v493 = vld [vmem:[%s3] sm:$0xff]
        %v494 = vld [vmem:[%s3 + $0x8] sm:$0xff]
        %v495 = vld [vmem:[%s3 + $0x10] sm:$0xff]
        %v496 = vld [vmem:[%s3 + $0x18] sm:$0xff]
        %v497 = vld [vmem:[%s4] sm:$0xff]
        %v498 = vld [vmem:[%s4 + $0x8] sm:$0xff]
        %v499 = vld [vmem:[%s4 + $0x10] sm:$0xff]
        %v500 = vld [vmem:[%s4 + $0x18] sm:$0xff]
        %vm501 = vcmask 15360
        %v503 = vsel %vm501, %v493, 0
        %v506 = vsel %vm501, %v494, 0
        %v509 = vsel %vm501, %v495, 0
        %v512 = vsel %vm501, %v496, 0
        %vm514 = vcmask 1041408
        %v516 = vsel %vm514, %v492, 0
        %518 = vmatpush.msra.mxu0 0.0
        %519 = vmatpush.msra.mxu0 0.0
        %520 = vmatpush.msra.mxu0 0.0
        %521 = vmatpush.msra.mxu0 0.0
        %522 = vmatpush.msra.mxu0 0.0
        %523 = vmatpush.msra.mxu0 0.0
        %524 = vmatpush.msra.mxu0 0.0
        %525 = vmatpush.msra.mxu0 0.0
        %526 = vmatpush.msra.mxu0 0.0
        %527 = vmatpush.msra.mxu0 0.0
        %528 = vmatpush.msra.mxu0 0.0
        %529 = vmatpush.msra.mxu0 0.0
        %530 = vmatpush.msra.mxu0 0.0
        %531 = vmatpush.msra.mxu0 0.0
        %532 = vmatpush.msra.mxu0 0.0
        %533 = vmatpush.msra.mxu0 %v516
        %534 = vmatmul.f32.gmra.mxu0 %v503
        %v535 = vpop.f32.mrf.mxu0
        %v536 = vadd.f32 %v497, %v535
        %537 = vmatmul.f32.gmra.mxu0 %v506
        %v538 = vpop.f32.mrf.mxu0
        %v539 = vadd.f32 %v498, %v538
        %540 = vmatmul.f32.gmra.mxu0 %v509
        %v541 = vpop.f32.mrf.mxu0
        %v542 = vadd.f32 %v499, %v541
        %543 = vmatmul.f32.gmra.mxu0 %v512
        %v544 = vpop.f32.mrf.mxu0
        %v545 = vadd.f32 %v500, %v544
        %546 = vdwg.mxu0
        %v547 = vxor.u32 %v536, 2147483648
        %v548 = vxor.u32 %v539, 2147483648
        %v549 = vxor.u32 %v542, 2147483648
        %v550 = vxor.u32 %v545, 2147483648
        %v551 = vmul.f32 %v547, 1.442695
        %v552 = vpow.pop %v551
        %v553 = vmul.f32 %v548, 1.442695
        %v554 = vpow.pop %v553
        %v555 = vmul.f32 %v549, 1.442695
        %v556 = vpow.pop %v555
        %v557 = vmul.f32 %v550, 1.442695
        %v558 = vpow.pop %v557
        %v559 = vadd.f32 %v552, 1.0
        %v560 = vadd.f32 %v554, 1.0
        %v561 = vadd.f32 %v556, 1.0
        %v562 = vadd.f32 %v558, 1.0
        %v563 = vrcp.pop %v559
        %v564 = vmul.f32 %v559, %v563
        %v565 = vsub.f32 1.0, %v564
        %v566 = vmul.f32 %v563, %v565
        %v567 = vadd.f32 %v563, %v566
        %vm568 = vweird.f32 %v559
        %vm569 = vweird.f32 %v563
        %vm570 = vmor %vm568, %vm569
        %v571 = vsel %vm570, %v563, %v567
        %v572 = vand.u32 2147483647, %v559
        %vm573 = vcmp.eq.f32.partialorder %v572, 8.507059e+37
        %v574 = vand.u32 %v559, 2147483648
        %v575 = vor.u32 1.1754944e-38, %v574
        %v576 = vsel %vm573, %v575, %v571
        %v577 = vmul.f32 1.0, %v576
        %v578 = vrcp.pop %v560
        %v579 = vmul.f32 %v560, %v578
        %v580 = vsub.f32 1.0, %v579
        %v581 = vmul.f32 %v578, %v580
        %v582 = vadd.f32 %v578, %v581
        %vm583 = vweird.f32 %v560
        %vm584 = vweird.f32 %v578
        %vm585 = vmor %vm583, %vm584
        %v586 = vsel %vm585, %v578, %v582
        %v587 = vand.u32 2147483647, %v560
        %vm588 = vcmp.eq.f32.partialorder %v587, 8.507059e+37
        %v589 = vand.u32 %v560, 2147483648
        %v590 = vor.u32 1.1754944e-38, %v589
        %v591 = vsel %vm588, %v590, %v586
        %v592 = vmul.f32 1.0, %v591
        %v593 = vrcp.pop %v561
        %v594 = vmul.f32 %v561, %v593
        %v595 = vsub.f32 1.0, %v594
        %v596 = vmul.f32 %v593, %v595
        %v597 = vadd.f32 %v593, %v596
        %vm598 = vweird.f32 %v561
        %vm599 = vweird.f32 %v593
        %vm600 = vmor %vm598, %vm599
        %v601 = vsel %vm600, %v593, %v597
        %v602 = vand.u32 2147483647, %v561
        %vm603 = vcmp.eq.f32.partialorder %v602, 8.507059e+37
        %v604 = vand.u32 %v561, 2147483648
        %v605 = vor.u32 1.1754944e-38, %v604
        %v606 = vsel %vm603, %v605, %v601
        %v607 = vmul.f32 1.0, %v606
        %v608 = vrcp.pop %v562
        %v609 = vmul.f32 %v562, %v608
        %v610 = vsub.f32 1.0, %v609
        %v611 = vmul.f32 %v608, %v610
        %v612 = vadd.f32 %v608, %v611
        %vm613 = vweird.f32 %v562
        %vm614 = vweird.f32 %v608
        %vm615 = vmor %vm613, %vm614
        %v616 = vsel %vm615, %v608, %v612
        %v617 = vand.u32 2147483647, %v562
        %vm618 = vcmp.eq.f32.partialorder %v617, 8.507059e+37
        %v619 = vand.u32 %v562, 2147483648
        %v620 = vor.u32 1.1754944e-38, %v619
        %v621 = vsel %vm618, %v620, %v616
        %v622 = vmul.f32 1.0, %v621
        %v623 = vmul.f32 %v577, %v446
        %v624 = vmul.f32 %v592, %v461
        %v625 = vmul.f32 %v607, %v476
        %v626 = vmul.f32 %v622, %v491
        %v627 = vld [vmem:[%s6] sm:$0xff]
        %v628 = vld [vmem:[%s6 + $0x8] sm:$0xff]
        %v629 = vld [vmem:[%s6 + $0x10] sm:$0x1]
        %v630 = vld [vmem:[%s6 + $0x18] sm:$0x1]
        %v631 = vld [vmem:[%s5] sm:$0xff]
        %v632 = vld [vmem:[%s5 + $0x8] sm:$0x1]
        %s633 = sld [smem:[#allocation2]]
        %v635 = vsel %vm368, %v631, 0
        %v638 = vsel %vm368, %v632, 0
        %640 = vmatpush.msra.mxu0 0.0
        %641 = vmatpush.msra.mxu0 0.0
        %642 = vmatpush.msra.mxu0 0.0
        %643 = vmatpush.msra.mxu0 0.0
        %644 = vmatpush.msra.mxu0 0.0
        %645 = vmatpush.msra.mxu0 0.0
        %646 = vmatpush.msra.mxu0 0.0
        %647 = vmatpush.msra.mxu0 0.0
        %648 = vmatpush.msra.mxu0 0.0
        %649 = vmatpush.msra.mxu0 0.0
        %650 = vmatpush.msra.mxu0 0.0
        %651 = vmatpush.msra.mxu0 0.0
        %652 = vmatpush.msra.mxu0 %v333
        %653 = vmatpush.msra.mxu0 %v331
        %654 = vmatpush.msra.mxu0 %v329
        %655 = vmatpush.msra.mxu0 %v327
        %656 = vmatmul.f32.gmra.mxu0 %v635
        %v657 = vpop.f32.mrf.mxu0
        %v658 = vadd.f32 0.0, %v657
        %659 = vmatmul.f32.gmra.mxu0 %v638
        %v660 = vpop.f32.mrf.mxu0
        %v661 = vadd.f32 0.0, %v660
        %662 = vdwg.mxu0
        %663 = vmatpush.msra.mxu0 0.0
        %664 = vmatpush.msra.mxu0 0.0
        %665 = vmatpush.msra.mxu0 0.0
        %666 = vmatpush.msra.mxu0 0.0
        %667 = vmatpush.msra.mxu0 0.0
        %668 = vmatpush.msra.mxu0 0.0
        %669 = vmatpush.msra.mxu0 0.0
        %670 = vmatpush.msra.mxu0 0.0
        %671 = vmatpush.msra.mxu0 0.0
        %672 = vmatpush.msra.mxu0 0.0
        %673 = vmatpush.msra.mxu0 0.0
        %674 = vmatpush.msra.mxu0 0.0
        %675 = vmatpush.msra.mxu0 %v334
        %676 = vmatpush.msra.mxu0 %v332
        %677 = vmatpush.msra.mxu0 %v330
        %678 = vmatpush.msra.mxu0 %v328
        %679 = vmatmul.f32.gmra.mxu0 %v635
        %v680 = vpop.f32.mrf.mxu0
        %v681 = vadd.f32 0.0, %v680
        %682 = vmatmul.f32.gmra.mxu0 %v638
        %v683 = vpop.f32.mrf.mxu0
        %v684 = vadd.f32 0.0, %v683
        %685 = vdwg.mxu0
        %v686 = vmul.f32 %v658, %v627
        %v687 = vmul.f32 %v681, %v628
        %v688 = vmul.f32 %v661, %v629
        %v689 = vmul.f32 %v684, %v630
        %690 = vrot.lane.b32.xlu0 %v686, 17
        %v691 = vpop.permute.xlu0 %690
        %692 = vrot.lane.b32.xlu0 %v687, 17
        %v693 = vpop.permute.xlu0 %692
        %v694 = vlaneseq
        %v695 = vand.u32 %v694, 127
        %vm696 = vcmp.lt.s32.totalorder %v695, 17
        %v697 = vsel %vm696, %v691, %v693
        %v698 = vsel %vm696, %v693, %v691
        %v699 = vstv %s633
        %v700 = vadd.f32 %v698, %v699
        %v701 = vadd.f32 %v697, %v699
        %v704 = vrot.slane %v686, 1
        %v705 = vrot.slane %v687, 1
        %708 = vrot.lane.b32.xlu0 %v704, 16
        %v709 = vpop.permute.xlu0 %708
        %710 = vrot.lane.b32.xlu0 %v705, 16
        %v711 = vpop.permute.xlu0 %710
        %vm712 = vcmp.lt.s32.totalorder %v695, 16
        %v713 = vsel %vm712, %v709, %v711
        %v714 = vsel %vm712, %v711, %v709
        %v715 = vadd.f32 %v700, %v714
        %v716 = vadd.f32 %v701, %v713
        %v717 = vrot.slane %v686, 2
        %v718 = vrot.slane %v687, 2
        %721 = vrot.lane.b32.xlu0 %v717, 15
        %v722 = vpop.permute.xlu0 %721
        %723 = vrot.lane.b32.xlu0 %v718, 15
        %v724 = vpop.permute.xlu0 %723
        %vm725 = vcmp.lt.s32.totalorder %v695, 15
        %v726 = vsel %vm725, %v722, %v724
        %v727 = vsel %vm725, %v724, %v722
        %v728 = vadd.f32 %v715, %v727
        %v729 = vadd.f32 %v716, %v726
        %v730 = vrot.slane %v686, 3
        %v731 = vrot.slane %v687, 3
        %734 = vrot.lane.b32.xlu0 %v730, 1
        %v735 = vpop.permute.xlu0 %734
        %736 = vrot.lane.b32.xlu0 %v731, 1
        %v737 = vpop.permute.xlu0 %736
        %vm738 = vcmp.lt.s32.totalorder %v695, 1
        %v739 = vsel %vm738, %v735, %v737
        %v740 = vsel %vm738, %v737, %v735
        %v741 = vadd.f32 %v728, %v740
        %v742 = vadd.f32 %v729, %v739
        %v743 = vrot.slane %v686, 4
        %v744 = vrot.slane %v687, 4
        %v747 = vadd.f32 %v741, %v743
        %v748 = vadd.f32 %v742, %v744
        %v749 = vrot.slane %v686, 5
        %v750 = vrot.slane %v687, 5
        %753 = vrot.lane.b32.xlu0 %v749, 127
        %v754 = vpop.permute.xlu0 %753
        %755 = vrot.lane.b32.xlu0 %v750, 127
        %v756 = vpop.permute.xlu0 %755
        %vm757 = vcmp.lt.s32.totalorder %v695, 127
        %v758 = vsel %vm757, %v754, %v756
        %v759 = vsel %vm757, %v756, %v754
        %v760 = vadd.f32 %v747, %v758
        %v761 = vadd.f32 %v748, %v759
        %v762 = vrot.slane %v686, 6
        %v763 = vrot.slane %v687, 6
        %766 = vrot.lane.b32.xlu0 %v762, 113
        %v767 = vpop.permute.xlu0 %766
        %768 = vrot.lane.b32.xlu0 %v763, 113
        %v769 = vpop.permute.xlu0 %768
        %vm770 = vcmp.lt.s32.totalorder %v695, 113
        %v771 = vsel %vm770, %v767, %v769
        %v772 = vsel %vm770, %v769, %v767
        %v773 = vadd.f32 %v760, %v771
        %v774 = vadd.f32 %v761, %v772
        %v775 = vrot.slane %v686, 7
        %v776 = vrot.slane %v687, 7
        %779 = vrot.lane.b32.xlu0 %v775, 112
        %v780 = vpop.permute.xlu0 %779
        %781 = vrot.lane.b32.xlu0 %v776, 112
        %v782 = vpop.permute.xlu0 %781
        %vm783 = vcmp.lt.s32.totalorder %v695, 112
        %v784 = vsel %vm783, %v780, %v782
        %v785 = vsel %vm783, %v782, %v780
        %v786 = vadd.f32 %v773, %v784
        %v787 = vadd.f32 %v774, %v785
        %788 = vrot.lane.b32.xlu0 %v688, 111
        %v789 = vpop.permute.xlu0 %788
        %790 = vrot.lane.b32.xlu0 %v689, 111
        %v791 = vpop.permute.xlu0 %790
        %vm792 = vcmp.lt.s32.totalorder %v695, 111
        %v793 = vsel %vm792, %v789, %v791
        %v794 = vsel %vm792, %v791, %v789
        %v795 = vadd.f32 %v786, %v793
        %v796 = vadd.f32 %v787, %v794
        %v797 = vxor.u32 %v795, 2147483648
        %v798 = vxor.u32 %v796, 2147483648
        %v799 = vmul.f32 %v797, 1.442695
        %v800 = vpow.pop %v799
        %v801 = vmul.f32 %v798, 1.442695
        %v802 = vpow.pop %v801
        %v803 = vadd.f32 %v800, 1.0
        %v804 = vadd.f32 %v802, 1.0
        %v805 = vrcp.pop %v803
        %v806 = vmul.f32 %v803, %v805
        %v807 = vsub.f32 1.0, %v806
        %v808 = vmul.f32 %v805, %v807
        %v809 = vadd.f32 %v805, %v808
        %vm810 = vweird.f32 %v803
        %vm811 = vweird.f32 %v805
        %vm812 = vmor %vm810, %vm811
        %v813 = vsel %vm812, %v805, %v809
        %v814 = vand.u32 2147483647, %v803
        %vm815 = vcmp.eq.f32.partialorder %v814, 8.507059e+37
        %v816 = vand.u32 %v803, 2147483648
        %v817 = vor.u32 1.1754944e-38, %v816
        %v818 = vsel %vm815, %v817, %v813
        %v819 = vmul.f32 1.0, %v818
        %v820 = vrcp.pop %v804
        %v821 = vmul.f32 %v804, %v820
        %v822 = vsub.f32 1.0, %v821
        %v823 = vmul.f32 %v820, %v822
        %v824 = vadd.f32 %v820, %v823
        %vm825 = vweird.f32 %v804
        %vm826 = vweird.f32 %v820
        %vm827 = vmor %vm825, %vm826
        %v828 = vsel %vm827, %v820, %v824
        %v829 = vand.u32 2147483647, %v804
        %vm830 = vcmp.eq.f32.partialorder %v829, 8.507059e+37
        %v831 = vand.u32 %v804, 2147483648
        %v832 = vor.u32 1.1754944e-38, %v831
        %v833 = vsel %vm830, %v832, %v828
        %v834 = vmul.f32 1.0, %v833
        %836 = vset.pattern.permute.xlu0 0
        %837 = vperm.xlu0 %836, %v623
        %v838 = vpop.permute.xlu0 %837
        %841 = vset.pattern.permute.xlu0 0
        %842 = vperm.xlu0 %841, %v624
        %v843 = vpop.permute.xlu0 %842
        %846 = vset.pattern.permute.xlu0 0
        %847 = vperm.xlu0 %846, %v625
        %v848 = vpop.permute.xlu0 %847
        %851 = vset.pattern.permute.xlu0 0
        %852 = vperm.xlu0 %851, %v626
        %v853 = vpop.permute.xlu0 %852
        %v855 = vperm.slane %v819, 0
        %v856 = vperm.slane %v834, 0
        %v857 = vadd.f32 %v838, %v855
        %v858 = vadd.f32 %v838, %v856
        %v859 = vadd.f32 %v843, %v855
        %v860 = vadd.f32 %v843, %v856
        %v861 = vadd.f32 %v848, %v855
        %v862 = vadd.f32 %v848, %v856
        %v863 = vadd.f32 %v853, %v855
        %v864 = vadd.f32 %v853, %v856
        %v865 = vmul.f32 %v327, %v857
        %v866 = vmul.f32 %v328, %v858
        %v867 = vmul.f32 %v329, %v859
        %v868 = vmul.f32 %v330, %v860
        %v869 = vmul.f32 %v331, %v861
        %v870 = vmul.f32 %v332, %v862
        %v871 = vmul.f32 %v333, %v863
        %v872 = vmul.f32 %v334, %v864
        %873 = vst [vmem:[%s326] sm:$0xff] %v865
        %874 = vst [vmem:[%s326 + $0x8] sm:$0xff] %v866
        %875 = vst [vmem:[%s326 + $0x10] sm:$0xff] %v867
        %876 = vst [vmem:[%s326 + $0x18] sm:$0xff] %v868
        %877 = vst [vmem:[%s326 + $0x20] sm:$0xff] %v869
        %878 = vst [vmem:[%s326 + $0x28] sm:$0xff] %v870
        %879 = vst [vmem:[%s326 + $0x30] sm:$0xff] %v871
        %880 = vst [vmem:[%s326 + $0x38] sm:$0xff] %v872
        %s881 = sand.u32 %s207, 1
        %s882 = scalar_lea.sflag [#allocation5], %s881
        %s883 = sand.u32 %s207, 1
        %s884 = smul.addr %s883, 64
        %s885 = scalar_lea.vmem [#allocation6], %s884
        // Predicated region
        $region57: #{tpu_custom_call.1} parent=51 // pred_check
          %p886 = pneg %p217
        $region58: #{tpu_custom_call.1} parent=51 // pred_check_branch
          %888 = sbr.rel (%p886) target = $region60
        $region59: #{tpu_custom_call.1} parent=51 // pred_region
          %890 = vsyncadd %s882, 0
          %s891 = smul.addr %s26, 8
          %s892 = smul.addr %s891, 8
          %s893 = scalar_lea.hbm %s8, %s892
          %s894 = sshll.u32 %s885, 4
          %s895 = int_to_ptr.vmem [resolvable:$true] %s894
          %s896 = sshll.u32 %s893, 4
          %s897 = int_to_ptr.hbm [resolvable:$true] %s896
          %902 = dma.vmem_to_hbm [thread:$0]  %s895, 1024, %s897, %s882, 256, 256, 16
        $region60: #{tpu_custom_call.1} parent=51 // pred_fallthru
          _
      $region52: #{tpu_custom_call.1} parent=5 // pred_fallthru
        _
      %p903 = scmp.le.s32.totalorder 2, %s21
      // Predicated region
      $region61: #{tpu_custom_call.1} parent=5 // pred_check
        %p904 = pneg %p903
      $region62: #{tpu_custom_call.1} parent=5 // pred_check_branch
        %906 = sbr.rel (%p904) target = $region64
      $region63: #{tpu_custom_call.1} parent=5 // pred_region
        %s907 = ssub.s32 %s21, 2
        // Predicated region
        $region65: #{tpu_custom_call.1} parent=63 // pred_check
          %p908 = pneg %p223
        $region66: #{tpu_custom_call.1} parent=63 // pred_check_branch
          %910 = sbr.rel (%p908) target = $region68
        $region67: #{tpu_custom_call.1} parent=63 // pred_region
          %s911 = sand.u32 %s208, 1
          %s912 = scalar_lea.sflag [#allocation5], %s911
          %s913 = sand.u32 %s208, 1
          %s914 = smul.addr %s913, 64
          %s915 = scalar_lea.vmem [#allocation6], %s914
          %917 = dma.done %s912, 1024
        $region68: #{tpu_custom_call.1} parent=63 // pred_fallthru
          _
      $region64: #{tpu_custom_call.1} parent=5 // pred_fallthru
        _
    $region6: #{tpu_custom_call.1} parent=1 // loop_footer
      %s25 = sadd.s32 1, %s21
    $region7: #{tpu_custom_call.1} parent=1 // loop_footer_branch
      %20 = sbr.rel target = $region3
    $region8: #{tpu_custom_call.1} parent=1 // loop_exit
      _
    %918 = vsyncpa [#allocation4], 1
    %s919 = scalar_lea.sflag [#allocation4], 1
    %920 = vsyncpa %s919, 1
    %921 = vsyncpa [#allocation5], 1
    %s922 = scalar_lea.sflag [#allocation5], 1
    %923 = vsyncpa %s922, 1

</llo_original>
